<compile_context>
chip_gen: v6e
topology: v6e:2x2x1
jax: 0.10.0
libtpu: 0.0.40
codegen_flags: <defaults>
</compile_context>

<pallas_src>
import math
from functools import partial

import jax
import jax.numpy as jnp
from jax.experimental import pallas as pl
from jax.experimental.pallas import tpu as pltpu

# ---- configs.ANCHOR.* (deterministic, in-script) ----------------------------
POSITIVE_LABEL = 1
NEGATIVE_LABEL = 0
IGNORE_LABEL = -1

# BalancedL1Loss defaults (Libra R-CNN): alpha=0.5, gamma=1.5, beta=1.0
BL1_ALPHA = 0.5
BL1_GAMMA = 1.5
BL1_BETA = 1.0

NEG_POS_RATIO = 1
LAMBDA_REG = 1.0
LAMBDA_CLS = 1.0

_NEG_SENTINEL = -1.0          # CE >= 0, so -1 marks "not a negative anchor"


def _multibox_kernel(pred_box_ref, pred_cls_ref, gt_box_ref, gt_cls_ref,
                     neg_ce_ref, partials_ref):
    """Per-anchor losses for one lane-dense block of anchors.

    pred_box_ref: (4, TB)   pred_cls_ref: (C, TB)
    gt_box_ref:   (4, TB)   gt_cls_ref:   (1, TB) int32
    Outputs:
      neg_ce_ref  : (1, TB) f32  -- CE where anchor is negative, else -1 sentinel
      partials_ref: (8, 128) f32 -- per-block partial sums:
          row 0: sum of positive-anchor CE      row 1: sum of positive box loss
          row 2: number of positive anchors     row 3: number of negative anchors
    """
    gc = gt_cls_ref[...]                                   # (1, TB) int32
    logits = pred_cls_ref[...].astype(jnp.float32)         # (C, TB)
    pb = pred_box_ref[...].astype(jnp.float32)             # (4, TB)
    gb = gt_box_ref[...].astype(jnp.float32)               # (4, TB)

    pos = gc == POSITIVE_LABEL                             # (1, TB) bool
    neg = gc == NEGATIVE_LABEL                             # (1, TB) bool

    # ---- per-anchor cross-entropy: logsumexp(logits) - logits[target] ----
    # Class axis sits on the sublanes, so these are cheap sublane (XLU) reduces.
    m = jnp.max(logits, axis=0, keepdims=True)             # (1, TB)
    lse = m + jnp.log(jnp.sum(jnp.exp(logits - m), axis=0, keepdims=True))

    n_classes = logits.shape[0]
    tgt = jnp.clip(gc, 0, n_classes - 1)                   # (1, TB)
    # One-hot gather on the full (C, TB) tile: full 8-sublane vregs + one
    # sublane reduce, instead of ~3C VALU ops on 1/8-full (1, TB) vregs.
    cls_iota = jax.lax.broadcasted_iota(jnp.int32, logits.shape, 0)   # (C, TB)
    tgt_logit = jnp.sum(jnp.where(cls_iota == tgt, logits, 0.0),
                        axis=0, keepdims=True)             # (1, TB)
    ce = lse - tgt_logit                                   # (1, TB), >= 0

    # Full-N stream used by hard-negative mining in the wrapper (lane-dense).
    neg_ce_ref[...] = jnp.where(neg, ce, _NEG_SENTINEL)

    # ---- BalancedL1 box regression loss on positive anchors ----
    diff = jnp.abs(pb - gb)                                # (4, TB)
    b = math.exp(BL1_GAMMA / BL1_ALPHA) - 1.0
    small = (BL1_ALPHA / b) * (b * diff + 1.0) * jnp.log(b * diff / BL1_BETA + 1.0) \
        - BL1_ALPHA * diff
    large = BL1_GAMMA * diff + BL1_GAMMA / b - BL1_ALPHA * BL1_BETA
    bl1 = jnp.where(diff < BL1_BETA, small, large)         # (4, TB)

    # ---- per-block partial sums (direct row writes, no iota/where chains) ----
    s_pos_ce = jnp.sum(jnp.where(pos, ce, 0.0))
    s_loc = jnp.sum(jnp.where(pos, bl1, 0.0))              # loc temporary folded away
    s_npos = jnp.sum(pos.astype(jnp.float32))
    s_nneg = jnp.sum(neg.astype(jnp.float32))

    partials_ref[...] = jnp.zeros_like(partials_ref)
    partials_ref[0:1, :] = jnp.broadcast_to(s_pos_ce, (1, 128))
    partials_ref[1:2, :] = jnp.broadcast_to(s_loc, (1, 128))
    partials_ref[2:3, :] = jnp.broadcast_to(s_npos, (1, 128))
    partials_ref[3:4, :] = jnp.broadcast_to(s_nneg, (1, 128))


def _num_tensorcores():
    """Best-effort TensorCore count (v7x parts have 2; v5e/v6e have 1)."""
    try:
        info = pltpu.get_tpu_info()
        for attr in ("num_cores", "core_count", "num_tensorcores"):
            v = getattr(info, attr, None)
            if v is not None:
                return max(1, int(v))
    except Exception:
        pass
    return 1


def _choose_anchor_block(n_anchors, n_classes, *, target_anchors=32768):
    """Largest lane-dense anchor block (multiple of 128) that
      * stays under a ~24 MiB double-buffered VMEM budget (fits the default
        scoped limit on v5e/v6e/v7x),
      * keeps >=2 grid steps only on multi-TensorCore parts (v7x megacore),
      * preferentially divides the 128-padded anchor count so no extra pad copy.
    """
    chunks = pl.cdiv(n_anchors, 128)                 # 128-anchor lane chunks

    rows = n_classes + 4 + 4 + 1 + 1                 # pc + pb + gb + gc + neg_ce
    bytes_per_chunk = rows * 128 * 4 * 2             # f32, double-buffered
    vmem_budget = 24 * 1024 * 1024
    max_chunks = max(1, min(target_anchors // 128, vmem_budget // bytes_per_chunk))

    if _num_tensorcores() >= 2 and chunks > 1:
        max_chunks = max(1, min(max_chunks, chunks // 2))

    blk = min(max_chunks, chunks)
    for d in range(blk, 0, -1):                      # largest divisor of `chunks` <= blk
        if chunks % d == 0:
            if 2 * d >= blk:                         # only take it if not too small
                blk = d
            break
    return blk * 128


def _per_anchor_losses(pred_boxes_t, pred_classes_t, gt_boxes_t, gt_classes_t, tb):
    """Runs the Pallas kernel. Inputs are transposed (rows, N_pad), N_pad % tb == 0."""
    C, n_pad = pred_classes_t.shape
    grid_steps = n_pad // tb

    bytes_accessed = (n_pad * (4 + C + 4 + 1) * 4          # inputs
                      + n_pad * 4                          # neg_ce output
                      + grid_steps * 8 * 128 * 4)          # partial-sum tiles
    cost = pl.CostEstimate(flops=n_pad * (12 * C + 60),
                           transcendentals=n_pad * (C + 6),
                           bytes_accessed=bytes_accessed)

    anchor_spec = lambda rows: pl.BlockSpec((rows, tb), lambda i: (0, i))

    return pl.pallas_call(
        _multibox_kernel,
        out_shape=(jax.ShapeDtypeStruct((1, n_pad), jnp.float32),
                   jax.ShapeDtypeStruct((grid_steps, 8, 128), jnp.float32)),
        grid_spec=pltpu.PrefetchScalarGridSpec(
            num_scalar_prefetch=0,
            grid=(grid_steps,),
            in_specs=[anchor_spec(4), anchor_spec(C), anchor_spec(4), anchor_spec(1)],
            out_specs=[anchor_spec(1),
                       # first dim squeezed -> kernel sees an (8, 128) ref
                       pl.BlockSpec((None, 8, 128), lambda i: (i, 0, 0))],
        ),
        compiler_params=pltpu.CompilerParams(
            dimension_semantics=("parallel",)),
        cost_estimate=cost,
    )(pred_boxes_t, pred_classes_t, gt_boxes_t, gt_classes_t)


@partial(jax.jit, static_argnames=("max_hard_negatives",))
def multibox_loss(predicted_boxes, predicted_classes, gt_bboxes, gt_classes,
                  *, max_hard_negatives=None):
    """JAX/Pallas equivalent of MultiBoxLoss.forward.

    predicted_boxes:   (B, A, 4) float
    predicted_classes: (B, A, C) float
    gt_bboxes:         (B, A, 4) float
    gt_classes:        (B, A)    int
    Returns (localization_loss, confidence_loss) scalars (f32).
    """
    B, A, C = predicted_classes.shape
    N = B * A

    # Lane-dense layout: anchors on the last (lane) axis.
    # TODO(synk): emit class-/coord-major activations upstream so these
    # relayout transposes (an extra HBM pass over the inputs) disappear.
    pb = predicted_boxes.reshape(N, 4).T
    pc = predicted_classes.reshape(N, C).T
    gb = gt_bboxes.reshape(N, 4).T
    gc = gt_classes.reshape(1, N).astype(jnp.int32)

    tb = _choose_anchor_block(N, C)
    n128 = -(-N // 128) * 128
    n_pad = -(-n128 // tb) * tb        # usually == n128 since tb divides it
    pad = n_pad - N
    if pad:
        pb = jnp.pad(pb, ((0, 0), (0, pad)))
        pc = jnp.pad(pc, ((0, 0), (0, pad)))
        gb = jnp.pad(gb, ((0, 0), (0, pad)))
        gc = jnp.pad(gc, ((0, 0), (0, pad)), constant_values=IGNORE_LABEL)

    neg_ce, partials = _per_anchor_losses(pb, pc, gb, gc, tb)

    sums = jnp.sum(partials[:, :4, 0], axis=0)              # (4,)
    cls_pos = sums[0]
    loc_sum = sums[1]
    n_pos = sums[2].astype(jnp.int32)                       # Nv == k_positives
    n_neg = sums[3].astype(jnp.int32)

    # localization loss
    safe_nv = jnp.maximum(n_pos, 1).astype(jnp.float32)
    loc_loss = LAMBDA_REG / safe_nv * loc_sum
    loc_loss = jnp.where(n_pos > 0, loc_loss, 0.0)

    # hard-negative mining: sum of the K largest negative CE values.
    # Sentinels (-1) always sink below real CE values (which are >= 0).
    neg_ce_flat = neg_ce[0]
    static_k = n_pad if max_hard_negatives is None else min(int(max_hard_negatives), n_pad)
    # TODO(synk): at production anchor counts, also emit per-block top-k
    # candidates from the kernel so this top_k runs on a small candidate set
    # instead of the full-N stream.
    top_vals, _ = jax.lax.top_k(neg_ce_flat, static_k)
    K = jnp.minimum(jnp.minimum(n_pos * NEG_POS_RATIO, n_neg), static_k)
    cls_neg = jnp.sum(jnp.where(jnp.arange(static_k) < K, top_vals, 0.0))

    Ns = n_pos + K
    safe_ns = jnp.maximum(Ns, 1).astype(jnp.float32)
    conf_loss = LAMBDA_CLS / safe_ns * (cls_pos + cls_neg)
    conf_loss = jnp.where(n_pos > 0, conf_loss, 0.0)

    return loc_loss, conf_loss


if __name__ == "__main__":
    key = jax.random.PRNGKey(0)
    k1, k2, k3, k4 = jax.random.split(key, 4)

    B, A, C = 2, 128, 8  # batch, anchors per image, number of classes
    predicted_boxes = jax.random.normal(k1, (B, A, 4), dtype=jnp.float32)
    predicted_classes = jax.random.normal(k2, (B, A, C), dtype=jnp.float32)
    gt_bboxes = jax.random.normal(k3, (B, A, 4), dtype=jnp.float32)
    # anchor labels: -1 (ignore), 0 (negative), 1 (positive)
    gt_classes = jax.random.randint(k4, (B, A), minval=-1, maxval=2, dtype=jnp.int32)

    # Static bound on mined negatives (>= NEG_POS_RATIO * max possible positives)
    # keeps top_k a partial selection rather than a full sort at large N.
    loc_loss, conf_loss = multibox_loss(
        predicted_boxes, predicted_classes, gt_bboxes, gt_classes,
        max_hard_negatives=B * A)
    jax.block_until_ready((loc_loss, conf_loss))

    assert jnp.isfinite(loc_loss) and jnp.isfinite(conf_loss)
    print("KERNEL_OK")
</pallas_src>

<mosaic_0001>
module attributes {stable_mosaic.version = 11 : i64} {
  func.func @_multibox_kernel(%arg0: i32, %arg1: memref<4x256xf32, #tpu.memory_space<vmem>>, %arg2: memref<8x256xf32, #tpu.memory_space<vmem>>, %arg3: memref<4x256xf32, #tpu.memory_space<vmem>>, %arg4: memref<1x256xi32, #tpu.memory_space<vmem>>, %arg5: memref<1x256xf32, #tpu.memory_space<vmem>>, %arg6: memref<1x8x128xf32, #tpu.memory_space<vmem>>) attributes {dimension_semantics = [#tpu.dimension_semantics<parallel>], iteration_bounds = array<i64: 1>, scalar_prefetch = 0 : i64, scratch_operands = 0 : i64, tpu.core_type = #tpu.core_type<tc>, window_params = [{transform_indices = @transform_0, window_bounds = array<i64: 4, 256>}, {transform_indices = @transform_1, window_bounds = array<i64: 8, 256>}, {transform_indices = @transform_2, window_bounds = array<i64: 4, 256>}, {transform_indices = @transform_3, window_bounds = array<i64: 1, 256>}, {transform_indices = @transform_4, window_bounds = array<i64: 1, 256>}, {transform_indices = @transform_5, window_bounds = array<i64: 1, 8, 128>}]} {
    %c0 = arith.constant 0 : index
    %c0_0 = arith.constant 0 : index
    %0 = vector.load %arg4[%c0, %c0_0] : memref<1x256xi32, #tpu.memory_space<vmem>>, vector<1x256xi32>
    %c0_1 = arith.constant 0 : index
    %c0_2 = arith.constant 0 : index
    %1 = vector.load %arg2[%c0_1, %c0_2] : memref<8x256xf32, #tpu.memory_space<vmem>>, vector<8x256xf32>
    %c0_3 = arith.constant 0 : index
    %c0_4 = arith.constant 0 : index
    %2 = vector.load %arg1[%c0_3, %c0_4] : memref<4x256xf32, #tpu.memory_space<vmem>>, vector<4x256xf32>
    %c0_5 = arith.constant 0 : index
    %c0_6 = arith.constant 0 : index
    %3 = vector.load %arg3[%c0_5, %c0_6] : memref<4x256xf32, #tpu.memory_space<vmem>>, vector<4x256xf32>
    %c1_i32 = arith.constant 1 : i32
    %4 = vector.broadcast %c1_i32 : i32 to vector<1x256xi32>
    %5 = arith.cmpi eq, %0, %4 : vector<1x256xi32>
    %c0_i32 = arith.constant 0 : i32
    %6 = vector.broadcast %c0_i32 : i32 to vector<1x256xi32>
    %7 = arith.cmpi eq, %0, %6 : vector<1x256xi32>
    %cst = arith.constant dense<0xFF800000> : vector<256xf32>
    %8 = vector.multi_reduction <maximumf>, %1, %cst [0] : vector<8x256xf32> to vector<256xf32>
    %9 = vector.shape_cast %8 : vector<256xf32> to vector<1x256xf32>
    %10 = vector.broadcast %9 : vector<1x256xf32> to vector<8x256xf32>
    %11 = arith.subf %1, %10 : vector<8x256xf32>
    %12 = math.exp %11 : vector<8x256xf32>
    %cst_7 = arith.constant dense<0.000000e+00> : vector<256xf32>
    %13 = vector.multi_reduction <add>, %12, %cst_7 [0] : vector<8x256xf32> to vector<256xf32>
    %14 = vector.shape_cast %13 : vector<256xf32> to vector<1x256xf32>
    %15 = math.log %14 : vector<1x256xf32>
    %16 = arith.addf %9, %15 : vector<1x256xf32>
    %c0_i32_8 = arith.constant 0 : i32
    %c7_i32 = arith.constant 7 : i32
    %17 = vector.broadcast %c0_i32_8 : i32 to vector<1x256xi32>
    %18 = arith.maxsi %17, %0 : vector<1x256xi32>
    %19 = vector.broadcast %c7_i32 : i32 to vector<1x256xi32>
    %20 = arith.minsi %19, %18 : vector<1x256xi32>
    %21 = tpu.iota {dimensions = array<i32: 0>} : vector<8x256xi32>
    %22 = vector.broadcast %20 : vector<1x256xi32> to vector<8x256xi32>
    %23 = arith.cmpi eq, %21, %22 : vector<8x256xi32>
    %cst_9 = arith.constant 0.000000e+00 : f32
    %24 = vector.broadcast %cst_9 : f32 to vector<8x256xf32>
    %25 = arith.select %23, %1, %24 : vector<8x256xi1>, vector<8x256xf32>
    %cst_10 = arith.constant dense<0.000000e+00> : vector<256xf32>
    %26 = vector.multi_reduction <add>, %25, %cst_10 [0] : vector<8x256xf32> to vector<256xf32>
    %27 = vector.shape_cast %26 : vector<256xf32> to vector<1x256xf32>
    %28 = arith.subf %16, %27 : vector<1x256xf32>
    %cst_11 = arith.constant -1.000000e+00 : f32
    %29 = vector.broadcast %cst_11 : f32 to vector<1x256xf32>
    %30 = arith.select %7, %28, %29 : vector<1x256xi1>, vector<1x256xf32>
    %c0_12 = arith.constant 0 : index
    %c0_13 = arith.constant 0 : index
    %31 = vector.load %arg5[%c0_12, %c0_13] : memref<1x256xf32, #tpu.memory_space<vmem>>, vector<1x256xf32>
    tpu.vector_store %arg5[%c0_12, %c0_13], %30 {strides = array<i32>} : memref<1x256xf32, #tpu.memory_space<vmem>>, vector<1x256xf32>,
    %32 = arith.subf %2, %3 : vector<4x256xf32>
    %33 = math.absf %32 : vector<4x256xf32>
    %cst_14 = arith.constant 19.085537 : f32
    %34 = vector.broadcast %cst_14 : f32 to vector<4x256xf32>
    %35 = arith.mulf %34, %33 : vector<4x256xf32>
    %cst_15 = arith.constant 1.000000e+00 : f32
    %36 = vector.broadcast %cst_15 : f32 to vector<4x256xf32>
    %37 = arith.addf %35, %36 : vector<4x256xf32>
    %cst_16 = arith.constant 0.0261978488 : f32
    %38 = vector.broadcast %cst_16 : f32 to vector<4x256xf32>
    %39 = arith.mulf %38, %37 : vector<4x256xf32>
    %cst_17 = arith.constant 19.085537 : f32
    %40 = vector.broadcast %cst_17 : f32 to vector<4x256xf32>
    %41 = arith.mulf %40, %33 : vector<4x256xf32>
    %cst_18 = arith.constant 1.000000e+00 : f32
    %42 = vector.broadcast %cst_18 : f32 to vector<4x256xf32>
    %43 = arith.divf %41, %42 : vector<4x256xf32>
    %cst_19 = arith.constant 1.000000e+00 : f32
    %44 = vector.broadcast %cst_19 : f32 to vector<4x256xf32>
    %45 = arith.addf %43, %44 : vector<4x256xf32>
    %46 = math.log %45 : vector<4x256xf32>
    %47 = arith.mulf %39, %46 : vector<4x256xf32>
    %cst_20 = arith.constant 5.000000e-01 : f32
    %48 = vector.broadcast %cst_20 : f32 to vector<4x256xf32>
    %49 = arith.mulf %48, %33 : vector<4x256xf32>
    %50 = arith.subf %47, %49 : vector<4x256xf32>
    %cst_21 = arith.constant 1.500000e+00 : f32
    %51 = vector.broadcast %cst_21 : f32 to vector<4x256xf32>
    %52 = arith.mulf %51, %33 : vector<4x256xf32>
    %cst_22 = arith.constant 0.0785935446 : f32
    %53 = vector.broadcast %cst_22 : f32 to vector<4x256xf32>
    %54 = arith.addf %52, %53 : vector<4x256xf32>
    %cst_23 = arith.constant 5.000000e-01 : f32
    %55 = vector.broadcast %cst_23 : f32 to vector<4x256xf32>
    %56 = arith.subf %54, %55 : vector<4x256xf32>
    %cst_24 = arith.constant 1.000000e+00 : f32
    %57 = vector.broadcast %cst_24 : f32 to vector<4x256xf32>
    %58 = arith.cmpf olt, %33, %57 : vector<4x256xf32>
    %59 = arith.select %58, %50, %56 : vector<4x256xi1>, vector<4x256xf32>
    %cst_25 = arith.constant 0.000000e+00 : f32
    %60 = vector.broadcast %cst_25 : f32 to vector<1x256xf32>
    %61 = arith.select %5, %28, %60 : vector<1x256xi1>, vector<1x256xf32>
    %62 = vector.shape_cast %61 : vector<1x256xf32> to vector<1x1x256xf32>
    %cst_26 = arith.constant dense<0.000000e+00> : vector<1xf32>
    %63 = vector.multi_reduction <add>, %62, %cst_26 [1, 2] : vector<1x1x256xf32> to vector<1xf32>
    %64 = vector.shape_cast %63 : vector<1xf32> to vector<1x1x1xf32>
    %65 = vector.extract %64[0, 0, 0] : f32 from vector<1x1x1xf32>
    %cst_27 = arith.constant 0.000000e+00 : f32
    %66 = vector.shape_cast %5 : vector<1x256xi1> to vector<1x256xi1>
    %67 = vector.broadcast %66 : vector<1x256xi1> to vector<4x256xi1>
    %68 = vector.broadcast %cst_27 : f32 to vector<4x256xf32>
    %69 = arith.select %67, %59, %68 : vector<4x256xi1>, vector<4x256xf32>
    %70 = vector.shape_cast %69 : vector<4x256xf32> to vector<1x4x256xf32>
    %cst_28 = arith.constant dense<0.000000e+00> : vector<1xf32>
    %71 = vector.multi_reduction <add>, %70, %cst_28 [1, 2] : vector<1x4x256xf32> to vector<1xf32>
    %72 = vector.shape_cast %71 : vector<1xf32> to vector<1x1x1xf32>
    %73 = vector.extract %72[0, 0, 0] : f32 from vector<1x1x1xf32>
    %74 = arith.extui %5 : vector<1x256xi1> to vector<1x256xi32>
    %75 = arith.sitofp %74 : vector<1x256xi32> to vector<1x256xf32>
    %76 = vector.shape_cast %75 : vector<1x256xf32> to vector<1x1x256xf32>
    %cst_29 = arith.constant dense<0.000000e+00> : vector<1xf32>
    %77 = vector.multi_reduction <add>, %76, %cst_29 [1, 2] : vector<1x1x256xf32> to vector<1xf32>
    %78 = vector.shape_cast %77 : vector<1xf32> to vector<1x1x1xf32>
    %79 = vector.extract %78[0, 0, 0] : f32 from vector<1x1x1xf32>
    %80 = arith.extui %7 : vector<1x256xi1> to vector<1x256xi32>
    %81 = arith.sitofp %80 : vector<1x256xi32> to vector<1x256xf32>
    %82 = vector.shape_cast %81 : vector<1x256xf32> to vector<1x1x256xf32>
    %cst_30 = arith.constant dense<0.000000e+00> : vector<1xf32>
    %83 = vector.multi_reduction <add>, %82, %cst_30 [1, 2] : vector<1x1x256xf32> to vector<1xf32>
    %84 = vector.shape_cast %83 : vector<1xf32> to vector<1x1x1xf32>
    %85 = vector.extract %84[0, 0, 0] : f32 from vector<1x1x1xf32>
    %cst_31 = arith.constant 0.000000e+00 : f32
    %86 = vector.broadcast %cst_31 : f32 to vector<8x128xf32>
    %c0_32 = arith.constant 0 : index
    %c0_33 = arith.constant 0 : index
    %c0_34 = arith.constant 0 : index
    %87 = vector.load %arg6[%c0_32, %c0_33, %c0_34] : memref<1x8x128xf32, #tpu.memory_space<vmem>>, vector<1x8x128xf32>
    %88 = vector.shape_cast %87 : vector<1x8x128xf32> to vector<8x128xf32>
    %89 = vector.shape_cast %86 : vector<8x128xf32> to vector<1x8x128xf32>
    tpu.vector_store %arg6[%c0_32, %c0_33, %c0_34], %89 {strides = array<i32>} : memref<1x8x128xf32, #tpu.memory_space<vmem>>, vector<1x8x128xf32>,
    %90 = vector.broadcast %65 : f32 to vector<1x128xf32>
    %c0_35 = arith.constant 0 : index
    %c0_36 = arith.constant 0 : index
    %c0_37 = arith.constant 0 : index
    %91 = vector.load %arg6[%c0_35, %c0_36, %c0_37] : memref<1x8x128xf32, #tpu.memory_space<vmem>>, vector<1x1x128xf32>
    %92 = vector.shape_cast %91 : vector<1x1x128xf32> to vector<1x128xf32>
    %93 = vector.shape_cast %90 : vector<1x128xf32> to vector<1x1x128xf32>
    tpu.vector_store %arg6[%c0_35, %c0_36, %c0_37], %93 {strides = array<i32>} : memref<1x8x128xf32, #tpu.memory_space<vmem>>, vector<1x1x128xf32>,
    %94 = vector.broadcast %73 : f32 to vector<1x128xf32>
    %c0_38 = arith.constant 0 : index
    %c1 = arith.constant 1 : index
    %c0_39 = arith.constant 0 : index
    %95 = vector.load %arg6[%c0_38, %c1, %c0_39] : memref<1x8x128xf32, #tpu.memory_space<vmem>>, vector<1x1x128xf32>
    %96 = vector.shape_cast %95 : vector<1x1x128xf32> to vector<1x128xf32>
    %97 = vector.shape_cast %94 : vector<1x128xf32> to vector<1x1x128xf32>
    tpu.vector_store %arg6[%c0_38, %c1, %c0_39], %97 {strides = array<i32>} : memref<1x8x128xf32, #tpu.memory_space<vmem>>, vector<1x1x128xf32>,
    %98 = vector.broadcast %79 : f32 to vector<1x128xf32>
    %c0_40 = arith.constant 0 : index
    %c2 = arith.constant 2 : index
    %c0_41 = arith.constant 0 : index
    %99 = vector.load %arg6[%c0_40, %c2, %c0_41] : memref<1x8x128xf32, #tpu.memory_space<vmem>>, vector<1x1x128xf32>
    %100 = vector.shape_cast %99 : vector<1x1x128xf32> to vector<1x128xf32>
    %101 = vector.shape_cast %98 : vector<1x128xf32> to vector<1x1x128xf32>
    tpu.vector_store %arg6[%c0_40, %c2, %c0_41], %101 {strides = array<i32>} : memref<1x8x128xf32, #tpu.memory_space<vmem>>, vector<1x1x128xf32>,
    %102 = vector.broadcast %85 : f32 to vector<1x128xf32>
    %c0_42 = arith.constant 0 : index
    %c3 = arith.constant 3 : index
    %c0_43 = arith.constant 0 : index
    %103 = vector.load %arg6[%c0_42, %c3, %c0_43] : memref<1x8x128xf32, #tpu.memory_space<vmem>>, vector<1x1x128xf32>
    %104 = vector.shape_cast %103 : vector<1x1x128xf32> to vector<1x128xf32>
    %105 = vector.shape_cast %102 : vector<1x128xf32> to vector<1x1x128xf32>
    tpu.vector_store %arg6[%c0_42, %c3, %c0_43], %105 {strides = array<i32>} : memref<1x8x128xf32, #tpu.memory_space<vmem>>, vector<1x1x128xf32>,
    return
  }
  func.func @transform_0(%arg0: i32) -> (i32, i32) {
    %c0_i32 = arith.constant 0 : i32
    %c0_i32_0 = arith.constant 0 : i32
    return %c0_i32, %arg0 : i32, i32
  }
  func.func @transform_1(%arg0: i32) -> (i32, i32) {
    %c0_i32 = arith.constant 0 : i32
    %c0_i32_0 = arith.constant 0 : i32
    return %c0_i32, %arg0 : i32, i32
  }
  func.func @transform_2(%arg0: i32) -> (i32, i32) {
    %c0_i32 = arith.constant 0 : i32
    %c0_i32_0 = arith.constant 0 : i32
    return %c0_i32, %arg0 : i32, i32
  }
  func.func @transform_3(%arg0: i32) -> (i32, i32) {
    %c0_i32 = arith.constant 0 : i32
    %c0_i32_0 = arith.constant 0 : i32
    return %c0_i32, %arg0 : i32, i32
  }
  func.func @transform_4(%arg0: i32) -> (i32, i32) {
    %c0_i32 = arith.constant 0 : i32
    %c0_i32_0 = arith.constant 0 : i32
    return %c0_i32, %arg0 : i32, i32
  }
  func.func @transform_5(%arg0: i32) -> (i32, i32, i32) {
    %c0_i32 = arith.constant 0 : i32
    %c0_i32_0 = arith.constant 0 : i32
    %c0_i32_1 = arith.constant 0 : i32
    return %arg0, %c0_i32, %c0_i32_0 : i32, i32, i32
  }
}

</mosaic_0001>

<llo_original>
// kernel: multibox_loss.1
$region0: #{multibox_loss.1}
  #allocation0 [shape = 'u32[]', space=smem, size = 0x4, offset = 0x4, fixed_abs, tag = 'smem constant byte address 0x4 - core index']
  #allocation1 [shape = 'u32[144,128]{1,0:T(1,128)}', space=vmem, size = 0x12000, scoped, tag = 'internal scratch']
  %s0 = inlined_call_operand.vmem [shape: f32[4,256], index: 0, kind: input, shape index: {}]
  %s1 = inlined_call_operand.hbm [shape: f32[8,256], index: 1, kind: input, shape index: {}]
  %s2 = inlined_call_operand.hbm [shape: f32[4,256], index: 2, kind: input, shape index: {}]
  %s3 = inlined_call_operand.vmem [shape: s32[1,256], index: 3, kind: input, shape index: {}]
  %s4 = inlined_call_operand.vmem [shape: f32[1,256], index: 4, kind: output, shape index: {0}]
  %s5 = inlined_call_operand.vmem [shape: f32[1,8,128], index: 5, kind: output, shape index: {1}]
  %6 = xla_tuple %s4, %s5
  %s7 = sld [smem:[#allocation0]]
  $region42: #{multibox_loss.1} parent=0
    _
  %s9 = ssub.s32 1, %s7
  %s10 = scalar_select 0, %s9, %s7
  $region1: #{multibox_loss.1} parent=0
    #allocation2 [shape = 'u8[8192]{0}', space=vmem, size = 0x2000, scoped, tag = 'input window, operand 1, single buffered']
    #allocation3 [shape = 's32[1]{0}', space=sflag, size = 0x4, scoped, tag = 'scoped memory for multibox_loss.1']
    #allocation4 [shape = 'u8[4096]{0}', space=vmem, size = 0x1000, scoped, tag = 'input window, operand 2, single buffered']
    #allocation5 [shape = 's32[1]{0}', space=sflag, size = 0x4, scoped, tag = 'scoped memory for multibox_loss.1']
    %11 = vsyncpa [#allocation3], 0
    %12 = vsyncpa [#allocation5], 0
    // Predicated region
    $region2: #{multibox_loss.1} parent=1 // pred_check
      _
    $region3: #{multibox_loss.1} parent=1 // pred_check_branch
      %14 = sbr.rel (0) target = $region5
    $region4: #{multibox_loss.1} parent=1 // pred_region
      _
    $region5: #{multibox_loss.1} parent=1 // pred_fallthru
      _
    // Predicated region
    $region6: #{multibox_loss.1} parent=1 // pred_check
      _
    $region7: #{multibox_loss.1} parent=1 // pred_check_branch
      %16 = sbr.rel (0) target = $region9
    $region8: #{multibox_loss.1} parent=1 // pred_region
      %s18 = ssub.s32 256, 256
      %19 = vsyncadd [#allocation3], %s18
      %s21 = sshll.u32 [#allocation2], 4
      %s22 = int_to_ptr.vmem [resolvable:$true] %s21
      %24 = dma.hbm_to_vmem [thread:$0]  %s1, 256, %s22, [#allocation3]
    $region9: #{multibox_loss.1} parent=1 // pred_fallthru
      _
    // Predicated region
    $region10: #{multibox_loss.1} parent=1 // pred_check
      _
    $region11: #{multibox_loss.1} parent=1 // pred_check_branch
      %26 = sbr.rel (0) target = $region13
    $region12: #{multibox_loss.1} parent=1 // pred_region
      %s28 = ssub.s32 128, 128
      %29 = vsyncadd [#allocation5], %s28
      %s31 = sshll.u32 [#allocation4], 4
      %s32 = int_to_ptr.vmem [resolvable:$true] %s31
      %34 = dma.hbm_to_vmem [thread:$0]  %s2, 128, %s32, [#allocation5]
    $region13: #{multibox_loss.1} parent=1 // pred_fallthru
      _
    // Predicated region
    $region14: #{multibox_loss.1} parent=1 // pred_check
      _
    $region15: #{multibox_loss.1} parent=1 // pred_check_branch
      %36 = sbr.rel (0) target = $region17
    $region16: #{multibox_loss.1} parent=1 // pred_region
      _
    $region17: #{multibox_loss.1} parent=1 // pred_fallthru
      _
    // Predicated region
    $region18: #{multibox_loss.1} parent=1 // pred_check
      _
    $region19: #{multibox_loss.1} parent=1 // pred_check_branch
      %38 = sbr.rel (0) target = $region21
    $region20: #{multibox_loss.1} parent=1 // pred_region
      %39 = dma.done [#allocation3], 256
    $region21: #{multibox_loss.1} parent=1 // pred_fallthru
      _
    // Predicated region
    $region22: #{multibox_loss.1} parent=1 // pred_check
      _
    $region23: #{multibox_loss.1} parent=1 // pred_check_branch
      %41 = sbr.rel (0) target = $region25
    $region24: #{multibox_loss.1} parent=1 // pred_region
      %42 = dma.done [#allocation5], 128
    $region25: #{multibox_loss.1} parent=1 // pred_fallthru
      _
    %v43 = vld [vmem:[%s3] sm:$0x3]
    %v44 = vld [vmem:[#allocation2] sm:$0xff]
    %v45 = vld [vmem:[#allocation2 + $0x8] sm:$0xff]
    %v46 = vld [vmem:[%s0] sm:$0xff]
    %v47 = vld [vmem:[#allocation4] sm:$0xff]
    %vm48 = vcmp.eq.s32.totalorder %v43, 1
    %vm49 = vcmp.eq.s32.totalorder %v43, 0
    %v50 = vrot.slane %v44, 4
    %v51 = vmax.f32 %v44, %v50
    %v52 = vrot.slane %v51, 2
    %v53 = vmax.f32 %v51, %v52
    %v54 = vrot.slane %v53, 1
    %v55 = vmax.f32 %v53, %v54
    %v56 = vrot.slane %v45, 4
    %v57 = vmax.f32 %v45, %v56
    %v58 = vrot.slane %v57, 2
    %v59 = vmax.f32 %v57, %v58
    %v60 = vrot.slane %v59, 1
    %v61 = vmax.f32 %v59, %v60
    %v62 = vsub.f32 %v44, %v55
    %v63 = vsub.f32 %v45, %v61
    %v64 = vmul.f32 %v62, 1.442695
    %v65 = vpow.pop %v64
    %v66 = vmul.f32 %v63, 1.442695
    %v67 = vpow.pop %v66
    %v68 = vrot.slane %v65, 4
    %v69 = vadd.f32 %v65, %v68
    %v70 = vrot.slane %v69, 2
    %v71 = vadd.f32 %v69, %v70
    %v72 = vrot.slane %v71, 1
    %v73 = vadd.f32 %v71, %v72
    %v74 = vrot.slane %v67, 4
    %v75 = vadd.f32 %v67, %v74
    %v76 = vrot.slane %v75, 2
    %v77 = vadd.f32 %v75, %v76
    %v78 = vrot.slane %v77, 1
    %v79 = vadd.f32 %v77, %v78
    %v80 = vlog2.pop %v73
    %v81 = vmul.f32 %v80, 0.6931472
    %v82 = vlog2.pop %v79
    %v83 = vmul.f32 %v82, 0.6931472
    %v84 = vadd.f32 %v55, %v81
    %v85 = vadd.f32 %v61, %v83
    %vm86 = vcmp.gt.s32.totalorder %v43, 0
    %v87 = vsel %vm86, %v43, 0
    %vm88 = vcmp.lt.s32.totalorder %v87, 7
    %v89 = vsel %vm88, %v87, 7
    %v90 = vlaneseq
    %v91 = vshrl.u32 %v90, 7
    %v92 = vlaneseq
    %v93 = vshrl.u32 %v92, 7
    %v94 = vsub.s32 0, %v93
    %v95 = vrot.slane %v89, %v94
    %v96 = vlaneseq
    %v97 = vshrl.u32 %v96, 7
    %v98 = vsub.s32 1, %v97
    %v99 = vrot.slane %v89, %v98
    %vm100 = vcmp.eq.s32.totalorder %v91, %v95
    %vm101 = vcmp.eq.s32.totalorder %v91, %v99
    %v102 = vsel %vm100, %v44, 0.0
    %v103 = vsel %vm101, %v45, 0.0
    %v104 = vrot.slane %v102, 4
    %v105 = vadd.f32 %v102, %v104
    %v106 = vrot.slane %v105, 2
    %v107 = vadd.f32 %v105, %v106
    %v108 = vrot.slane %v107, 1
    %v109 = vadd.f32 %v107, %v108
    %v110 = vrot.slane %v103, 4
    %v111 = vadd.f32 %v103, %v110
    %v112 = vrot.slane %v111, 2
    %v113 = vadd.f32 %v111, %v112
    %v114 = vrot.slane %v113, 1
    %v115 = vadd.f32 %v113, %v114
    %v116 = vsub.f32 %v84, %v109
    %v117 = vsub.f32 %v85, %v115
    %v120 = vcombine.low %v116, %v117
    %v122 = vunpack.c.l.s4 1966171168
    %v123 = vunpack.c.0.s8 %v122
    %v124 = vlaneseq
    %v125 = vshrl.u32 %v124, 7
    %v126 = vsub.s32 %v123, %v125
    %v127 = vrot.slane %v120, %v126
    %v129 = vunpack.c.l.s4 1966171168
    %v130 = vunpack.c.0.s8 %v129
    %v131 = vlaneseq
    %v132 = vshrl.u32 %v131, 7
    %v133 = vsub.s32 %v130, %v132
    %v134 = vrot.slane %v127, %v133
    %v136 = vsel %vm49, %v134, -1.0
    %v137 = vlaneseq
    %vm138 = vcmp.ge.s32.totalorder %v137, 0
    %vm139 = vcmp.lt.s32.totalorder %v137, 256
    %vm140 = vmand %vm138, %vm139
    %141 = vst.msk [vmem:[%s4] sm:$0x3] %vm140, %v136
    %v142 = vsub.f32 %v46, %v47
    %v143 = vand.u32 2147483647, %v142
    %v144 = vmul.f32 %v143, 19.085537
    %v145 = vadd.f32 %v144, 1.0
    %v146 = vmul.f32 %v145, 0.026197849
    %v147 = vlog2.pop %v145
    %v148 = vmul.f32 %v147, 0.6931472
    %v149 = vmul.f32 %v146, %v148
    %v150 = vmul.f32 %v143, 0.5
    %v151 = vsub.f32 %v149, %v150
    %v152 = vmul.f32 %v143, 1.5
    %v153 = vadd.f32 %v152, 0.078593545
    %v154 = vsub.f32 %v153, 0.5
    %vm155 = vcmp.lt.f32.partialorder %v143, 1.0
    %v156 = vsel %vm155, %v151, %v154
    %v157 = vsel %vm48, %v134, 0.0
    %v159 = vlaneseq
    %v160 = vshrl.u32 %v159, 7
    %v161 = vsub.s32 0, %v160
    %v162 = vrot.slane %v157, %v161
    %v163 = vlaneseq
    %v164 = vshrl.u32 %v163, 7
    %v165 = vsub.s32 1, %v164
    %v166 = vrot.slane %v157, %v165
    %vm169 = vcmask 1040384
    %v170 = vsel %vm169, %v162, 0.0
    %v171 = vsel %vm169, %v166, 0.0
    %v172 = vadd.f32 %v170, %v171
    %173 = vadd.xlane.f32.xlu0 %v172
    %v174 = vpop.xlane.xlu0 %173
    %v175 = vrot.slane %v174, 4
    %v176 = vadd.f32 %v174, %v175
    %v177 = vrot.slane %v176, 2
    %v178 = vadd.f32 %v176, %v177
    %v179 = vrot.slane %v178, 1
    %v180 = vadd.f32 %v178, %v179
    %s181 = vtos %v180
    %v182 = vsel %vm48, 1, 0
    %v183 = vlaneseq
    %v184 = vshrl.u32 %v183, 7
    %v185 = vsub.s32 0, %v184
    %v186 = vrot.slane %v182, %v185
    %v187 = vlaneseq
    %v188 = vshrl.u32 %v187, 7
    %v189 = vsub.s32 1, %v188
    %v190 = vrot.slane %v182, %v189
    %vm191 = vcmp.eq.s32.totalorder %v186, 1
    %vm192 = vcmp.eq.s32.totalorder %v190, 1
    %v194 = vcombine.high %v156, %v156
    %v196 = vsel %vm191, %v156, 0.0
    %v197 = vsel %vm192, %v194, 0.0
    %vm198 = vcmask 1043456
    %v199 = vsel %vm198, %v196, 0.0
    %v200 = vsel %vm198, %v197, 0.0
    %v201 = vadd.f32 %v199, %v200
    %202 = vadd.xlane.f32.xlu0 %v201
    %v203 = vpop.xlane.xlu0 %202
    %v204 = vrot.slane %v203, 4
    %v205 = vadd.f32 %v203, %v204
    %v206 = vrot.slane %v205, 2
    %v207 = vadd.f32 %v205, %v206
    %v208 = vrot.slane %v207, 1
    %v209 = vadd.f32 %v207, %v208
    %s210 = vtos %v209
    %v211 = vcvt.s32.f32 %v182
    %v213 = vlaneseq
    %v214 = vshrl.u32 %v213, 7
    %v215 = vsub.s32 0, %v214
    %v216 = vrot.slane %v211, %v215
    %v217 = vlaneseq
    %v218 = vshrl.u32 %v217, 7
    %v219 = vsub.s32 1, %v218
    %v220 = vrot.slane %v211, %v219
    %v223 = vsel %vm169, %v216, 0.0
    %v224 = vsel %vm169, %v220, 0.0
    %v225 = vadd.f32 %v223, %v224
    %226 = vadd.xlane.f32.xlu0 %v225
    %v227 = vpop.xlane.xlu0 %226
    %v228 = vrot.slane %v227, 4
    %v229 = vadd.f32 %v227, %v228
    %v230 = vrot.slane %v229, 2
    %v231 = vadd.f32 %v229, %v230
    %v232 = vrot.slane %v231, 1
    %v233 = vadd.f32 %v231, %v232
    %s234 = vtos %v233
    %v235 = vsel %vm49, 1, 0
    %v236 = vcvt.s32.f32 %v235
    %v238 = vlaneseq
    %v239 = vshrl.u32 %v238, 7
    %v240 = vsub.s32 0, %v239
    %v241 = vrot.slane %v236, %v240
    %v242 = vlaneseq
    %v243 = vshrl.u32 %v242, 7
    %v244 = vsub.s32 1, %v243
    %v245 = vrot.slane %v236, %v244
    %v248 = vsel %vm169, %v241, 0.0
    %v249 = vsel %vm169, %v245, 0.0
    %v250 = vadd.f32 %v248, %v249
    %251 = vadd.xlane.f32.xlu0 %v250
    %v252 = vpop.xlane.xlu0 %251
    %v253 = vrot.slane %v252, 4
    %v254 = vadd.f32 %v252, %v253
    %v255 = vrot.slane %v254, 2
    %v256 = vadd.f32 %v254, %v255
    %v257 = vrot.slane %v256, 1
    %v258 = vadd.f32 %v256, %v257
    %s259 = vtos %v258
    %260 = vst [vmem:[%s5] sm:$0xff] 0.0
    %v261 = vstv %s181
    %262 = vst [vmem:[%s5] sm:$0x1] %v261
    %v263 = vstv %s210
    %264 = vst [vmem:[%s5 + $0x1] sm:$0x1] %v263
    %v265 = vstv %s234
    %266 = vst [vmem:[%s5 + $0x2] sm:$0x1] %v265
    %v267 = vstv %s259
    %268 = vst [vmem:[%s5 + $0x3] sm:$0x1] %v267
    // Predicated region
    $region26: #{multibox_loss.1} parent=1 // pred_check
      _
    $region27: #{multibox_loss.1} parent=1 // pred_check_branch
      %270 = sbr.rel (0) target = $region29
    $region28: #{multibox_loss.1} parent=1 // pred_region
      _
    $region29: #{multibox_loss.1} parent=1 // pred_fallthru
      _
    // Predicated region
    $region30: #{multibox_loss.1} parent=1 // pred_check
      _
    $region31: #{multibox_loss.1} parent=1 // pred_check_branch
      %272 = sbr.rel (0) target = $region33
    $region32: #{multibox_loss.1} parent=1 // pred_region
      _
    $region33: #{multibox_loss.1} parent=1 // pred_fallthru
      _
    // Predicated region
    $region34: #{multibox_loss.1} parent=1 // pred_check
      _
    $region35: #{multibox_loss.1} parent=1 // pred_check_branch
      %274 = sbr.rel (0) target = $region37
    $region36: #{multibox_loss.1} parent=1 // pred_region
      _
    $region37: #{multibox_loss.1} parent=1 // pred_fallthru
      _
    // Predicated region
    $region38: #{multibox_loss.1} parent=1 // pred_check
      _
    $region39: #{multibox_loss.1} parent=1 // pred_check_branch
      %276 = sbr.rel (0) target = $region41
    $region40: #{multibox_loss.1} parent=1 // pred_region
      _
    $region41: #{multibox_loss.1} parent=1 // pred_fallthru
      _
    %277 = vsyncpa [#allocation3], 1
    %278 = vsyncpa [#allocation5], 1

</llo_original>
